<compile_context>
chip_gen: v6e
topology: v6e:2x2x1
jax: 0.10.0
libtpu: 0.0.40
codegen_flags: <defaults>
</compile_context>

<pallas_src>
import math
import jax
import jax.numpy as jnp
from jax import lax
from jax.experimental import pallas as pl
from jax.experimental.pallas import tpu as pltpu


def _cdiv(a, b):
    return -(-a // b)


def _round_up(a, m):
    return _cdiv(a, m) * m


def _token_embedding_kernel(x_ref, w_ref, b_ref, o_ref):
    # x_ref: (TM, 3C) im2col rows   w_ref: (3C, D)   b_ref: (1, D) f32   o_ref: (TM, D)
    # Single MXU matmul over the merged contraction dim 3C, fp32 accumulation,
    # minimal epilogue (bias add + cast).  MXU-shape tuning is pointless: deeply HBM-bound.
    acc = jnp.dot(x_ref[...], w_ref[...], preferred_element_type=jnp.float32)
    o_ref[...] = (acc + b_ref[...]).astype(o_ref.dtype)


def _vmem_budget():
    """Generation-aware per-step VMEM budget and scoped limit."""
    try:
        cap = pltpu.get_tpu_info().vmem_capacity_bytes
    except Exception:  # be conservative (v7x: 64 MiB per TensorCore)
        cap = 64 * 1024 * 1024
    if cap >= 128 * 1024 * 1024:          # v5e / v6e
        return 48 * 1024 * 1024, 64 * 1024 * 1024
    return 24 * 1024 * 1024, 32 * 1024 * 1024   # v7x


def token_embedding(x, weight, bias, *, block_rows=2048,
                    compute_dtype=None, out_dtype=None):
    """Circular Conv1d(kernel_size=3, padding=1) token embedding.

    x:      (B, L, C) = (batch, seq_len, n_features) -- layout forward() receives
    weight: (D, C, K) -- PyTorch Conv1d weight layout, K == 3
    bias:   (D,)
    returns (B, L, D), matching TokenEmbedding.forward (the module's internal permutes cancel).

    compute_dtype / out_dtype default to x.dtype (exact fp32 Conv1d numerics for fp32 callers).
    Pass bfloat16 for both when the downstream transformer runs bf16: the kernel is
    output-HBM-bound, so bf16 output ~halves its runtime.
    """
    B, L, C = x.shape
    D, Cw, K = weight.shape
    assert Cw == C and K == 3
    out_dtype = x.dtype if out_dtype is None else jnp.dtype(out_dtype)
    compute_dtype = x.dtype if compute_dtype is None else jnp.dtype(compute_dtype)

    # ---- im2col with circular wrap along L ---------------------------------
    # column order per row (b, l): [x[l-1], x[l], x[l+1]]   (mod L, per batch element)
    # TODO(synk): could fold the +/-1 shifts into the kernel with pltpu.roll to skip this
    # materialization; not worth it while C (n_features) stays tiny.
    x_prev = jnp.roll(x, 1, axis=1)
    x_next = jnp.roll(x, -1, axis=1)
    C3 = 3 * C
    x_cat = jnp.concatenate([x_prev, x, x_next], axis=-1).reshape(B * L, C3)
    x_cat = x_cat.astype(compute_dtype)

    # ---- weight prepack: (D, C, K) -> (K*C, D), row index = k*C + c ---------
    w = jnp.transpose(weight, (2, 1, 0)).reshape(C3, D).astype(compute_dtype)
    b2 = bias.astype(jnp.float32).reshape(1, D)

    # ---- row tiling (no M/D padding, no output slice) -----------------------
    M = B * L
    in_b = jnp.dtype(compute_dtype).itemsize
    out_b = jnp.dtype(out_dtype).itemsize
    bf16 = jnp.dtype(jnp.bfloat16)
    sub = 16 if (jnp.dtype(compute_dtype) == bf16 or jnp.dtype(out_dtype) == bf16) else 8

    budget, vmem_limit = _vmem_budget()

    def vmem_bytes(t):
        return (2 * t * C3 * in_b      # x block (double buffered)
                + 2 * C3 * D * in_b    # weight (resident)
                + 2 * D * 4            # bias
                + 2 * t * D * out_b    # output block (double buffered)
                + t * D * 4)           # fp32 accumulator temporaries

    def fit(t):
        while t > sub and vmem_bytes(t) > budget:
            t = max(sub, _round_up(t // 2, sub))
        return t

    if M <= block_rows:
        tm = M                              # full-dim block: always layout-legal
        if vmem_bytes(tm) > budget:
            tm = fit(_round_up(M, sub))
    else:
        tm = fit(_round_up(block_rows, sub))

    # v7x has 2 TensorCores sharing the ("parallel",) grid: prefer an even (>=2) step count
    # when there are enough rows.  v5e/v6e (1 TC) are unaffected.
    steps = _cdiv(M, tm)
    if M >= 4 * sub and steps <= 8 and steps % 2 == 1:
        steps += 1
        tm = max(sub, _round_up(_cdiv(M, steps), sub))

    grid = (pl.cdiv(M, tm),)

    out = pl.pallas_call(
        _token_embedding_kernel,
        out_shape=jax.ShapeDtypeStruct((M, D), out_dtype),
        grid_spec=pltpu.PrefetchScalarGridSpec(
            num_scalar_prefetch=0,
            grid=grid,
            in_specs=[
                pl.BlockSpec((tm, C3), lambda i: (i, 0)),
                pl.BlockSpec((C3, D), lambda i: (0, 0)),
                pl.BlockSpec((1, D), lambda i: (0, 0)),
            ],
            out_specs=pl.BlockSpec((tm, D), lambda i: (i, 0)),
        ),
        compiler_params=pltpu.CompilerParams(
            dimension_semantics=("parallel",),
            vmem_limit_bytes=vmem_limit,
        ),
    )(x_cat, w, b2)

    return out.reshape(B, L, D)


if __name__ == "__main__":
    # small shapes consistent with the module
    B, L, n_features, d_model, K = 2, 32, 4, 32, 3

    key = jax.random.PRNGKey(0)
    kx, kw, kb = jax.random.split(key, 3)

    # input: (batch, seq_len, n_features) — what TokenEmbedding.forward receives
    x = jax.random.normal(kx, (B, L, n_features), dtype=jnp.float32)

    # deterministic param init mirroring the module:
    # kaiming_normal_(fan_in, leaky_relu) on Conv1d weight of shape (d_model, n_features, K)
    fan_in = n_features * K
    gain = math.sqrt(2.0 / (1.0 + 0.01 ** 2))            # leaky_relu default neg slope
    std = gain / math.sqrt(fan_in)
    weight = std * jax.random.normal(kw, (d_model, n_features, K), dtype=jnp.float32)
    # Conv1d default bias init: U(-1/sqrt(fan_in), 1/sqrt(fan_in))
    bound = 1.0 / math.sqrt(fan_in)
    bias = jax.random.uniform(kb, (d_model,), dtype=jnp.float32,
                              minval=-bound, maxval=bound)

    # pure-JAX reference of the circular conv, channels-last (full fp32 precision)
    x_pad = jnp.concatenate([x[:, -1:, :], x, x[:, :1, :]], axis=1)      # (B, L+2, C)
    ref = bias[None, None, :] + sum(
        jnp.einsum("blc,cd->bld", x_pad[:, k:k + L, :], weight[:, :, k].T,
                   precision=lax.Precision.HIGHEST)
        for k in range(K)
    )

    # default path: matches x.dtype (fp32) — exact module semantics, tight tolerance
    out_f32 = jax.jit(token_embedding)(x, weight, bias)
    out_f32 = jax.block_until_ready(out_f32)
    assert out_f32.shape == (B, L, d_model)
    assert jnp.allclose(out_f32, ref, atol=1e-4, rtol=1e-4)

    # opt-in fast path: bf16-fed MXU, fp32 accumulation, bf16 output (halves output HBM bytes)
    fast = jax.jit(lambda a, w, b: token_embedding(
        a, w, b, compute_dtype=jnp.bfloat16, out_dtype=jnp.bfloat16))
    out_bf16 = jax.block_until_ready(fast(x, weight, bias))
    assert out_bf16.shape == (B, L, d_model)
    assert jnp.allclose(out_bf16.astype(jnp.float32), ref, atol=6e-2, rtol=6e-2)

    print("KERNEL_OK")
</pallas_src>

<mosaic_0001>
module attributes {stable_mosaic.version = 11 : i64} {
  func.func @_token_embedding_kernel(%arg0: i32, %arg1: memref<32x12xf32, #tpu.memory_space<vmem>>, %arg2: memref<12x32xf32, #tpu.memory_space<vmem>>, %arg3: memref<1x32xf32, #tpu.memory_space<vmem>>, %arg4: memref<32x32xf32, #tpu.memory_space<vmem>>) attributes {dimension_semantics = [#tpu.dimension_semantics<parallel>], iteration_bounds = array<i64: 2>, scalar_prefetch = 0 : i64, scratch_operands = 0 : i64, tpu.core_type = #tpu.core_type<tc>, window_params = [{transform_indices = @transform_0, window_bounds = array<i64: 32, 12>}, {pipeline_mode = #tpu.pipeline_mode<synchronous>, transform_indices = @transform_1, window_bounds = array<i64: 12, 32>}, {pipeline_mode = #tpu.pipeline_mode<synchronous>, transform_indices = @transform_2, window_bounds = array<i64: 1, 32>}, {transform_indices = @transform_3, window_bounds = array<i64: 32, 32>}]} {
    %c0 = arith.constant 0 : index
    %c0_0 = arith.constant 0 : index
    %0 = vector.load %arg1[%c0, %c0_0] : memref<32x12xf32, #tpu.memory_space<vmem>>, vector<32x12xf32>
    %c0_1 = arith.constant 0 : index
    %c0_2 = arith.constant 0 : index
    %1 = vector.load %arg2[%c0_1, %c0_2] : memref<12x32xf32, #tpu.memory_space<vmem>>, vector<12x32xf32>
    %cst = arith.constant dense<0.000000e+00> : vector<32x32xf32>
    %2 = tpu.matmul %0, %1, %cst {dimension_numbers = #tpu.dot_dimension_numbers<[1], [0], [0], [1], [0, 0, 1, 1], [], []>} : vector<32x12xf32>, vector<12x32xf32>, vector<32x32xf32> -> vector<32x32xf32>
    %c0_3 = arith.constant 0 : index
    %c0_4 = arith.constant 0 : index
    %3 = vector.load %arg3[%c0_3, %c0_4] : memref<1x32xf32, #tpu.memory_space<vmem>>, vector<1x32xf32>
    %4 = vector.broadcast %3 : vector<1x32xf32> to vector<32x32xf32>
    %5 = arith.addf %2, %4 : vector<32x32xf32>
    %c0_5 = arith.constant 0 : index
    %c0_6 = arith.constant 0 : index
    %6 = vector.load %arg4[%c0_5, %c0_6] : memref<32x32xf32, #tpu.memory_space<vmem>>, vector<32x32xf32>
    tpu.vector_store %arg4[%c0_5, %c0_6], %5 {strides = array<i32>} : memref<32x32xf32, #tpu.memory_space<vmem>>, vector<32x32xf32>,
    return
  }
  func.func @transform_0(%arg0: i32) -> (i32, i32) {
    %c0_i32 = arith.constant 0 : i32
    %c0_i32_0 = arith.constant 0 : i32
    return %arg0, %c0_i32 : i32, i32
  }
  func.func @transform_1(%arg0: i32) -> (i32, i32) {
    %c0_i32 = arith.constant 0 : i32
    %c0_i32_0 = arith.constant 0 : i32
    %c0_i32_1 = arith.constant 0 : i32
    return %c0_i32, %c0_i32_0 : i32, i32
  }
  func.func @transform_2(%arg0: i32) -> (i32, i32) {
    %c0_i32 = arith.constant 0 : i32
    %c0_i32_0 = arith.constant 0 : i32
    %c0_i32_1 = arith.constant 0 : i32
    return %c0_i32, %c0_i32_0 : i32, i32
  }
  func.func @transform_3(%arg0: i32) -> (i32, i32) {
    %c0_i32 = arith.constant 0 : i32
    %c0_i32_0 = arith.constant 0 : i32
    return %arg0, %c0_i32 : i32, i32
  }
}

</mosaic_0001>

<llo_original>
// kernel: token_embedding.1
$region0: #{token_embedding.1}
  #allocation0 [shape = 'u32[]', space=smem, size = 0x4, offset = 0x4, fixed_abs, tag = 'smem constant byte address 0x4 - core index']
  #allocation1 [shape = 'u32[144,128]{1,0:T(1,128)}', space=vmem, size = 0x12000, scoped, tag = 'internal scratch']
  %s0 = inlined_call_operand.vmem [shape: f32[64,12], index: 0, kind: input, shape index: {}]
  %s1 = inlined_call_operand.vmem [shape: f32[12,32], index: 1, kind: input, shape index: {}]
  %s2 = inlined_call_operand.vmem [shape: f32[1,32], index: 2, kind: input, shape index: {}]
  %s3 = inlined_call_operand.hbm [shape: f32[64,32], index: 3, kind: output, shape index: {}]
  %s4 = sld [smem:[#allocation0]]
  $region45: #{token_embedding.1} parent=0
    _
  %s6 = ssub.s32 1, %s4
  %s7 = scalar_select 0, %s6, %s4
  $region1: #{token_embedding.1} parent=0
    #allocation2 [shape = 'u8[32768]{0}', space=vmem, size = 0x8000, scoped, tag = 'output window, operand 0']
    #allocation3 [shape = 's32[2]{0}', space=sflag, size = 0x8, scoped, tag = 'scoped memory for token_embedding.1']
    %8 = vsyncpa [#allocation3], 0
    %s9 = scalar_lea.sflag [#allocation3], 1
    %10 = vsyncpa %s9, 0
    loop: start=0, step=1, limit=4
    $region2: #{token_embedding.1} parent=1 // loop_pre_header
      _
    $region3: #{token_embedding.1} parent=1 // loop_header
      %s12 = sphi 0, %s16
      %p13 = scmp.ge.s32.totalorder %s12, 4
      %s22 = sphi 0, %s24
      %s25 = sphi 0, %s22
      %s26 = sphi 0, %s25
      %s42 = sphi 0, %s26
      %s46 = sphi 0, %s46
      %s48 = sphi 0, %s46
      %s49 = sphi 0, %s48
      %s63 = sphi 0, %s49
      %s67 = sphi 0, %s67
      %s69 = sphi 0, %s67
      %s70 = sphi 0, %s69
      %s84 = sphi 0, %s70
      %s90 = sphi 0, %s92
      %s93 = sphi 0, %s90
      %s94 = sphi 0, %s93
      %s110 = sphi 0, %s94
    $region4: #{token_embedding.1} parent=1 // loop_header_branch
      %15 = sbr.rel (%p13) target = $region8
    $region5: #{token_embedding.1} parent=1 // loop_body
      %s17 = ssub.s32 %s12, 1
      %s18 = ssub.s32 %s12, 2
      %s19 = sadd.s32 %s12, 1
      %s20 = ssub.s32 %s12, %s19
      %p21 = scmp.eq.s32.totalorder %s20, 0
      %s23 = sadd.s32 %s22, 1
      %s24 = scalar_select %p21, %s22, %s23
      %p27 = pneg %p21
      %p28 = scmp.eq.s32.totalorder %s12, 1
      %p29 = por %p27, %p28
      %p30 = scmp.ne.s32.totalorder %s22, %s25
      %p31 = scmp.eq.s32.totalorder %s12, 0
      %p32 = por %p30, %p31
      %p33 = scmp.ne.s32.totalorder %s22, %s25
      %p34 = scmp.eq.s32.totalorder %s17, 1
      %p35 = por %p33, %p34
      %p36 = scmp.ne.s32.totalorder %s25, %s26
      %p37 = scmp.eq.s32.totalorder %s17, 0
      %p38 = por %p36, %p37
      %p39 = scmp.ne.s32.totalorder %s25, %s26
      %p40 = scmp.eq.s32.totalorder %s18, 1
      %p41 = por %p39, %p40
      %p43 = scmp.ne.s32.totalorder %s26, %s42
      %p44 = scmp.eq.s32.totalorder %s18, 0
      %p45 = por %p43, %p44
      %s47 = sadd.s32 %s46, 1
      %p50 = scmp.eq.s32.totalorder %s12, 1
      %p51 = scmp.ne.s32.totalorder %s46, %s48
      %p52 = scmp.eq.s32.totalorder %s12, 0
      %p53 = por %p51, %p52
      %p54 = scmp.ne.s32.totalorder %s46, %s48
      %p55 = scmp.eq.s32.totalorder %s17, 1
      %p56 = por %p54, %p55
      %p57 = scmp.ne.s32.totalorder %s48, %s49
      %p58 = scmp.eq.s32.totalorder %s17, 0
      %p59 = por %p57, %p58
      %p60 = scmp.ne.s32.totalorder %s48, %s49
      %p61 = scmp.eq.s32.totalorder %s18, 1
      %p62 = por %p60, %p61
      %p64 = scmp.ne.s32.totalorder %s49, %s63
      %p65 = scmp.eq.s32.totalorder %s18, 0
      %p66 = por %p64, %p65
      %s68 = sadd.s32 %s67, 1
      %p71 = scmp.eq.s32.totalorder %s12, 1
      %p72 = scmp.ne.s32.totalorder %s67, %s69
      %p73 = scmp.eq.s32.totalorder %s12, 0
      %p74 = por %p72, %p73
      %p75 = scmp.ne.s32.totalorder %s67, %s69
      %p76 = scmp.eq.s32.totalorder %s17, 1
      %p77 = por %p75, %p76
      %p78 = scmp.ne.s32.totalorder %s69, %s70
      %p79 = scmp.eq.s32.totalorder %s17, 0
      %p80 = por %p78, %p79
      %p81 = scmp.ne.s32.totalorder %s69, %s70
      %p82 = scmp.eq.s32.totalorder %s18, 1
      %p83 = por %p81, %p82
      %p85 = scmp.ne.s32.totalorder %s70, %s84
      %p86 = scmp.eq.s32.totalorder %s18, 0
      %p87 = por %p85, %p86
      %s88 = ssub.s32 %s12, %s19
      %p89 = scmp.eq.s32.totalorder %s88, 0
      %s91 = sadd.s32 %s90, 1
      %s92 = scalar_select %p89, %s90, %s91
      %p95 = pneg %p89
      %p96 = scmp.eq.s32.totalorder %s12, 1
      %p97 = por %p95, %p96
      %p98 = scmp.ne.s32.totalorder %s90, %s93
      %p99 = scmp.eq.s32.totalorder %s12, 0
      %p100 = por %p98, %p99
      %p101 = scmp.ne.s32.totalorder %s90, %s93
      %p102 = scmp.eq.s32.totalorder %s17, 1
      %p103 = por %p101, %p102
      %p104 = scmp.ne.s32.totalorder %s93, %s94
      %p105 = scmp.eq.s32.totalorder %s17, 0
      %p106 = por %p104, %p105
      %p107 = scmp.ne.s32.totalorder %s93, %s94
      %p108 = scmp.eq.s32.totalorder %s18, 1
      %p109 = por %p107, %p108
      %p111 = scmp.ne.s32.totalorder %s94, %s110
      %p112 = scmp.eq.s32.totalorder %s18, 0
      %p113 = por %p111, %p112
      %p114 = scmp.le.s32.totalorder 1, %s12
      %p115 = scmp.lt.s32.totalorder %s12, 3
      %p116 = pnand %p114, %p115
      %p117 = pneg %p116
      // Predicated region
      $region9: #{token_embedding.1} parent=5 // pred_check
        _
      $region10: #{token_embedding.1} parent=5 // pred_check_branch
        %119 = sbr.rel (%p116) target = $region12
      $region11: #{token_embedding.1} parent=5 // pred_region
        %s120 = ssub.s32 %s12, 1
        // Predicated region
        $region13: #{token_embedding.1} parent=11 // pred_check
          %p121 = pneg %p59
        $region14: #{token_embedding.1} parent=11 // pred_check_branch
          %123 = sbr.rel (%p121) target = $region16
        $region15: #{token_embedding.1} parent=11 // pred_region
          _
        $region16: #{token_embedding.1} parent=11 // pred_fallthru
          _
        // Predicated region
        $region17: #{token_embedding.1} parent=11 // pred_check
          %p124 = pneg %p80
        $region18: #{token_embedding.1} parent=11 // pred_check_branch
          %126 = sbr.rel (%p124) target = $region20
        $region19: #{token_embedding.1} parent=11 // pred_region
          _
        $region20: #{token_embedding.1} parent=11 // pred_fallthru
          _
      $region12: #{token_embedding.1} parent=5 // pred_fallthru
        _
      %p127 = scmp.lt.s32.totalorder %s12, 2
      // Predicated region
      $region21: #{token_embedding.1} parent=5 // pred_check
        %p128 = pneg %p127
      $region22: #{token_embedding.1} parent=5 // pred_check_branch
        %130 = sbr.rel (%p128) target = $region24
      $region23: #{token_embedding.1} parent=5 // pred_region
        // Predicated region
        $region25: #{token_embedding.1} parent=23 // pred_check
          %p131 = pneg %p32
        $region26: #{token_embedding.1} parent=23 // pred_check_branch
          %133 = sbr.rel (%p131) target = $region28
        $region27: #{token_embedding.1} parent=23 // pred_region
          %s134 = smul.u32 4, %s12
          %p135 = scmp.lt.s32.totalorder %s134, 7
          %s136 = scalar_select %p135, %s134, 7
          %s137 = smul.addr %s136, 8
          %s138 = scalar_lea.vmem %s0, %s137
          %s139 = smul.u32 4, %s12
        $region28: #{token_embedding.1} parent=23 // pred_fallthru
          _
      $region24: #{token_embedding.1} parent=5 // pred_fallthru
        _
      %p140 = scmp.le.s32.totalorder 1, %s12
      %p141 = scmp.lt.s32.totalorder %s12, 3
      %p142 = pnand %p140, %p141
      %p143 = pneg %p142
      // Predicated region
      $region29: #{token_embedding.1} parent=5 // pred_check
        _
      $region30: #{token_embedding.1} parent=5 // pred_check_branch
        %145 = sbr.rel (%p142) target = $region32
      $region31: #{token_embedding.1} parent=5 // pred_region
        %s146 = ssub.s32 %s12, 1
        %s147 = smul.u32 4, %s17
        %p148 = scmp.lt.s32.totalorder %s147, 7
        %s149 = scalar_select %p148, %s147, 7
        %s150 = smul.addr %s149, 8
        %s151 = scalar_lea.vmem %s0, %s150
        %p152 = pneg %p38
        %p153 = pneg %p35
        %p154 = pneg %p59
        %p155 = pneg %p56
        %p156 = pneg %p80
        %p157 = pneg %p77
        %p158 = pneg %p106
        %p159 = pneg %p103
        %s160 = sand.u32 %s93, 1
        %s161 = scalar_lea.sflag [#allocation3], %s160
        %s162 = sand.u32 %s93, 1
        %s163 = smul.addr %s162, 32
        %s164 = scalar_lea.vmem [#allocation2], %s163
        %s165 = smul.u32 4, %s17
        %p166 = scmp.lt.s32.totalorder %s165, 7
        %s167 = scalar_select %p166, %s165, 7
        %s168 = smul.addr %s167, 8
        %s169 = scalar_lea.vmem %s0, %s168
        %s170 = smul.u32 4, %s17
        %s171 = smul.u32 4, %s17
        %v172 = vld [vmem:[%s169] sm:$0xff]
        %v173 = vld [vmem:[%s169 + $0x8] sm:$0xff]
        %v174 = vld [vmem:[%s169 + $0x10] sm:$0xff]
        %v175 = vld [vmem:[%s169 + $0x18] sm:$0xff]
        %v176 = vld [vmem:[%s1] sm:$0xff]
        %v177 = vld [vmem:[%s1 + $0x8] sm:$0xf]
        %v178 = vld [vmem:[%s2] sm:$0x1]
        %v180 = vlaneseq
        %v181 = vshrl.u32 %v180, 7
        %v182 = vsub.s32 0, %v181
        %v183 = vrot.slane %v178, %v182
        %vm185 = vcmask 97280
        %v187 = vsel %vm185, %v172, 0
        %v190 = vsel %vm185, %v173, 0
        %v193 = vsel %vm185, %v174, 0
        %v196 = vsel %vm185, %v175, 0
        %vm198 = vcmask 1043456
        %v200 = vsel %vm198, %v177, 0
        %202 = vmatprep.subr.mxu0 0.0
        %203 = vmatpush1.msra.mxu0 0.0
        %204 = vmatprep.subr.mxu0 0.0
        %205 = vmatpush1.msra.mxu0 0.0
        %206 = vmatprep.subr.mxu0 0.0
        %207 = vmatpush1.msra.mxu0 0.0
        %208 = vmatprep.subr.mxu0 0.0
        %209 = vmatpush1.msra.mxu0 0.0
        %210 = vmatprep.subr.mxu0 0.0
        %211 = vmatpush1.msra.mxu0 0.0
        %212 = vmatprep.subr.mxu0 0.0
        %213 = vmatpush1.msra.mxu0 0.0
        %214 = vmatprep.subr.mxu0 0.0
        %215 = vmatpush1.msra.mxu0 0.0
        %216 = vmatprep.subr.mxu0 0.0
        %217 = vmatpush1.msra.mxu0 0.0
        %218 = vmatprep.subr.mxu0 0.0
        %219 = vmatpush1.msra.mxu0 0.0
        %220 = vmatprep.subr.mxu0 0.0
        %221 = vmatpush1.msra.mxu0 0.0
        %222 = vmatprep.subr.mxu0 0.0
        %223 = vmatpush1.msra.mxu0 0.0
        %224 = vmatprep.subr.mxu0 0.0
        %225 = vmatpush1.msra.mxu0 0.0
        %226 = vmatprep.subr.mxu0 0.0
        %227 = vmatpush1.msra.mxu0 0.0
        %228 = vmatprep.subr.mxu0 0.0
        %229 = vmatpush1.msra.mxu0 0.0
        %230 = vmatprep.subr.mxu0 0.0
        %231 = vmatpush1.msra.mxu0 %v200
        %232 = vmatprep.subr.mxu0 0.0
        %233 = vmatpush1.msra.mxu0 %v176
        %234 = vmatprep.subr.mxu0 0.0
        %235 = vmatpush2.msra.mxu0 0.0
        %236 = vmatprep.subr.mxu0 0.0
        %237 = vmatpush2.msra.mxu0 0.0
        %238 = vmatprep.subr.mxu0 0.0
        %239 = vmatpush2.msra.mxu0 0.0
        %240 = vmatprep.subr.mxu0 0.0
        %241 = vmatpush2.msra.mxu0 0.0
        %242 = vmatprep.subr.mxu0 0.0
        %243 = vmatpush2.msra.mxu0 0.0
        %244 = vmatprep.subr.mxu0 0.0
        %245 = vmatpush2.msra.mxu0 0.0
        %246 = vmatprep.subr.mxu0 0.0
        %247 = vmatpush2.msra.mxu0 0.0
        %248 = vmatprep.subr.mxu0 0.0
        %249 = vmatpush2.msra.mxu0 0.0
        %250 = vmatprep.subr.mxu0 0.0
        %251 = vmatpush2.msra.mxu0 0.0
        %252 = vmatprep.subr.mxu0 0.0
        %253 = vmatpush2.msra.mxu0 0.0
        %254 = vmatprep.subr.mxu0 0.0
        %255 = vmatpush2.msra.mxu0 0.0
        %256 = vmatprep.subr.mxu0 0.0
        %257 = vmatpush2.msra.mxu0 0.0
        %258 = vmatprep.subr.mxu0 0.0
        %259 = vmatpush2.msra.mxu0 0.0
        %260 = vmatprep.subr.mxu0 0.0
        %261 = vmatpush2.msra.mxu0 0.0
        %262 = vmatprep.subr.mxu0 0.0
        %263 = vmatpush2.msra.mxu0 0.0
        %264 = vmatprep.subr.mxu0 0.0
        %265 = vmatpush2.msra.mxu0 0.0
        %266 = vmatprep.mubr.f32.mxu0 0.0
        %267 = vmatmul.mubr.f32.gmra.mxu0 %v187
        %v268 = vpop.f32.mrf.mxu0
        %v269 = vadd.f32 %v183, %v268
        %v270 = vpop.f32.mrf.mxu0
        %271 = vmatprep.mubr.f32.mxu0 0.0
        %272 = vmatmul.mubr.f32.gmra.mxu0 %v190
        %v273 = vpop.f32.mrf.mxu0
        %v274 = vadd.f32 %v183, %v273
        %v275 = vpop.f32.mrf.mxu0
        %276 = vmatprep.mubr.f32.mxu0 0.0
        %277 = vmatmul.mubr.f32.gmra.mxu0 %v193
        %v278 = vpop.f32.mrf.mxu0
        %v279 = vadd.f32 %v183, %v278
        %v280 = vpop.f32.mrf.mxu0
        %281 = vmatprep.mubr.f32.mxu0 0.0
        %282 = vmatmul.mubr.f32.gmra.mxu0 %v196
        %v283 = vpop.f32.mrf.mxu0
        %v284 = vadd.f32 %v183, %v283
        %v285 = vpop.f32.mrf.mxu0
        %286 = vdwg.mxu0
        %vm287 = vcmask 261120
        %288 = vst.msk [vmem:[%s164] sm:$0xff] %vm287, %v269
        %289 = vst.msk [vmem:[%s164 + $0x8] sm:$0xff] %vm287, %v274
        %290 = vst.msk [vmem:[%s164 + $0x10] sm:$0xff] %vm287, %v279
        %291 = vst.msk [vmem:[%s164 + $0x18] sm:$0xff] %vm287, %v284
        %s292 = sand.u32 %s93, 1
        %s293 = scalar_lea.sflag [#allocation3], %s292
        %s294 = sand.u32 %s93, 1
        %s295 = smul.addr %s294, 32
        %s296 = scalar_lea.vmem [#allocation2], %s295
        // Predicated region
        $region33: #{token_embedding.1} parent=31 // pred_check
          %p297 = pneg %p103
        $region34: #{token_embedding.1} parent=31 // pred_check_branch
          %299 = sbr.rel (%p297) target = $region36
        $region35: #{token_embedding.1} parent=31 // pred_region
          %s300 = smul.u32 4, %s17
          %s302 = ssub.s32 512, 512
          %303 = vsyncadd %s293, %s302
          %s304 = smul.addr %s300, 128
          %s305 = scalar_lea.hbm %s3, %s304
          %s306 = sshll.u32 %s296, 4
          %s307 = int_to_ptr.vmem [resolvable:$true] %s306
          %312 = dma.vmem_to_hbm [thread:$0]  %s307, 512, %s305, %s293, 128, 128, 8
        $region36: #{token_embedding.1} parent=31 // pred_fallthru
          _
      $region32: #{token_embedding.1} parent=5 // pred_fallthru
        _
      %p313 = scmp.le.s32.totalorder 2, %s12
      // Predicated region
      $region37: #{token_embedding.1} parent=5 // pred_check
        %p314 = pneg %p313
      $region38: #{token_embedding.1} parent=5 // pred_check_branch
        %316 = sbr.rel (%p314) target = $region40
      $region39: #{token_embedding.1} parent=5 // pred_region
        %s317 = ssub.s32 %s12, 2
        // Predicated region
        $region41: #{token_embedding.1} parent=39 // pred_check
          %p318 = pneg %p109
        $region42: #{token_embedding.1} parent=39 // pred_check_branch
          %320 = sbr.rel (%p318) target = $region44
        $region43: #{token_embedding.1} parent=39 // pred_region
          %s321 = sand.u32 %s94, 1
          %s322 = scalar_lea.sflag [#allocation3], %s321
          %s323 = sand.u32 %s94, 1
          %s324 = smul.addr %s323, 32
          %s325 = scalar_lea.vmem [#allocation2], %s324
          %326 = dma.done %s322, 512
        $region44: #{token_embedding.1} parent=39 // pred_fallthru
          _
      $region40: #{token_embedding.1} parent=5 // pred_fallthru
        _
    $region6: #{token_embedding.1} parent=1 // loop_footer
      %s16 = sadd.s32 1, %s12
    $region7: #{token_embedding.1} parent=1 // loop_footer_branch
      %11 = sbr.rel target = $region3
    $region8: #{token_embedding.1} parent=1 // loop_exit
      _
    %327 = vsyncpa [#allocation3], 1
    %s328 = scalar_lea.sflag [#allocation3], 1
    %329 = vsyncpa %s328, 1

</llo_original>
